<compile_context>
chip_gen: v7x
topology: tpu7x:2x2x1
jax: 0.10.0
libtpu: 0.0.40
codegen_flags: <defaults>
</compile_context>

<pallas_src>
import math
import functools

import jax
import jax.numpy as jnp
from jax.experimental import pallas as pl
from jax.experimental.pallas import tpu as pltpu

_LANES = 128
_SUBLANES = 8


def _round_up(n, m):
    return -(-n // m) * m


def _ave_mse_kernel(b_ref, pde_ref, out_ref, acc_ref, *, n_b, n_f):
    """Grid: (num_cores, steps_per_core); reduction axis last ("arbitrary").

    b_ref   : (2, rb, 128)        resident boundary slab [output_Nu; Nu]
    pde_ref : (7, tile_rows, 128) streamed collocation tile [t,x,y,u,u_t,u_xx,u_yy]
    out_ref : (1, 1, 1)           per-core loss contribution
    acc_ref : (8, 128) f32        lane-dense partial-sum accumulator (VMEM)
    """
    pi = math.pi
    c = pl.program_id(0)
    i = pl.program_id(1)
    n_steps = pl.num_programs(1)

    @pl.when(i == 0)
    def _init():
        acc_ref[...] = jnp.zeros_like(acc_ref)

    t = pde_ref[0]
    x = pde_ref[1]
    y = pde_ref[2]
    u = pde_ref[3]
    u_t = pde_ref[4]
    u_xx = pde_ref[5]
    u_yy = pde_ref[6]

    # 3 EUP transcendentals per element instead of 4:
    #   exp(-3t) == exp(-t)**3 ; reuse p = sin(pi x) * sin(pi y).
    e = jnp.exp(-t)
    p = jnp.sin(pi * x) * jnp.sin(pi * y)
    forcing = (2.0 * (pi * pi - 1.0)) * (e * p) + (e * e * e) * (p * p * p)

    res = u_t + u * u * u - u - u_xx - u_yy - forcing

    tile_rows = res.shape[0]
    blk = c * n_steps + i                       # global block index (row-major)
    # Only blocks that can contain indices >= n_f need masking.
    # int32 scalar math: fine for N_f < 2**31 elements.
    has_tail = (blk + 1) * (tile_rows * _LANES) > n_f

    @pl.when(jnp.logical_not(has_tail))
    def _acc_full():
        # Pure-VPU tree add into a lane-dense (8, 128) accumulator.
        acc_ref[...] += (res * res).reshape(-1, _SUBLANES, _LANES).sum(axis=0)

    @pl.when(has_tail)
    def _acc_tail():
        # Zero padding already yields an exactly-zero residual here, but mask
        # explicitly so the kernel stays robust to future edits of `forcing`.
        rows = jax.lax.broadcasted_iota(jnp.int32, res.shape, 0)
        lanes = jax.lax.broadcasted_iota(jnp.int32, res.shape, 1)
        flat_idx = (blk * tile_rows + rows) * _LANES + lanes
        rm = jnp.where(flat_idx < n_f, res, 0.0)
        acc_ref[...] += (rm * rm).reshape(-1, _SUBLANES, _LANES).sum(axis=0)

    @pl.when(i == n_steps - 1)
    def _finalize():
        # Single cross-lane/sublane reduce per core.
        loss_f = jnp.sum(acc_ref[...], keepdims=True) * (1.0 / n_f)     # (1, 1)
        db = b_ref[0] - b_ref[1]
        brows = jax.lax.broadcasted_iota(jnp.int32, db.shape, 0)
        blanes = jax.lax.broadcasted_iota(jnp.int32, db.shape, 1)
        db = jnp.where(brows * _LANES + blanes < n_b, db, 0.0)
        loss_b = jnp.sum(db * db, keepdims=True) * (1.0 / n_b)          # (1, 1)
        total = loss_f + jnp.where(c == 0, loss_b, jnp.zeros_like(loss_b))
        out_ref[...] = total[None]                                      # (1,1,1)


def ave_mse(t, x, y, output_Nu, Nu, u, u_t, u_xx, u_yy, u_t_grad=None, *,
            max_tile_rows=1024, num_cores=1, vmem_limit_bytes=None):
    """Pallas implementation of AVEMSE.forward (u_t_grad unused, as in torch).

    max_tile_rows : rows (of 128 lanes) per streamed collocation tile.
        1024 -> 3.5 MiB/block, 7 MiB double-buffered: safe under every chip's
        default scoped VMEM (incl. v5e's 16 MiB).  On v6e, 2048 together with
        vmem_limit_bytes=32<<20 amortizes per-step overhead a bit more.
    num_cores : leading "parallel" grid axis.  Set 2 on v7x so both
        TensorCores stream half of the collocation slab (per-core partial
        losses are summed in the wrapper).  Correct (serial) on 1-TC chips.
    """
    assert max_tile_rows % _SUBLANES == 0 and max_tile_rows > 0
    assert num_cores >= 1
    n_b = int(output_Nu.shape[0])
    n_f = int(u_t.shape[0])

    # Boundary slab: the two boundary arrays fused into one (2, rb, 128) f32
    # array (single stack+pad pass), resident in VMEM across the whole grid.
    b_flat = jnp.stack([jnp.asarray(output_Nu, jnp.float32).reshape(-1),
                        jnp.asarray(Nu, jnp.float32).reshape(-1)])
    rb = _round_up(max(-(-n_b // _LANES), 1), _SUBLANES)
    b_slab = jnp.pad(b_flat, ((0, 0), (0, rb * _LANES - n_b))
                     ).reshape(2, rb, _LANES)

    # Collocation slab: the 7 PDE streams fused into one (7, rows, 128) array
    # -> one DMA descriptor per grid step and a single-pass prep (stack+pad).
    # TODO(synk): t/x/y are fixed across training iterations; hoist their part
    # of the packing out of the training step to save the remaining HBM traffic.
    pde_flat = jnp.stack([jnp.asarray(a, jnp.float32).reshape(-1)
                          for a in (t, x, y, u, u_t, u_xx, u_yy)])
    rows_f = max(-(-n_f // _LANES), 1)
    tile_rows = min(max_tile_rows, _round_up(rows_f, _SUBLANES))
    blocks = -(-rows_f // tile_rows)
    steps_per_core = -(-blocks // num_cores)
    total_rows = num_cores * steps_per_core * tile_rows
    pde_slab = jnp.pad(pde_flat, ((0, 0), (0, total_rows * _LANES - n_f))
                       ).reshape(7, total_rows, _LANES)

    kernel = functools.partial(_ave_mse_kernel, n_b=n_b, n_f=n_f)

    grid_spec = pltpu.PrefetchScalarGridSpec(
        num_scalar_prefetch=0,
        grid=(num_cores, steps_per_core),
        in_specs=[
            pl.BlockSpec((2, rb, _LANES), lambda c, i: (0, 0, 0)),      # resident
            pl.BlockSpec((7, tile_rows, _LANES),
                         lambda c, i: (0, c * steps_per_core + i, 0)),  # streamed
        ],
        out_specs=pl.BlockSpec((1, 1, 1), lambda c, i: (c, 0, 0)),
        scratch_shapes=[pltpu.VMEM((_SUBLANES, _LANES), jnp.float32)],
    )

    out = pl.pallas_call(
        kernel,
        out_shape=jax.ShapeDtypeStruct((num_cores, 1, 1), jnp.float32),
        grid_spec=grid_spec,
        compiler_params=pltpu.CompilerParams(
            dimension_semantics=("parallel", "arbitrary"),
            vmem_limit_bytes=vmem_limit_bytes),
    )(b_slab, pde_slab)
    # Per-core partial losses (loss_b folded into core 0's entry).
    return jnp.sum(out)


def ave_mse_ref(t, x, y, output_Nu, Nu, u, u_t, u_xx, u_yy, u_t_grad=None):
    """Pure-JAX reference mirroring the PyTorch forward exactly."""
    pi = math.pi
    loss_b = jnp.sum((output_Nu - Nu) ** 2) / output_Nu.shape[0]
    forcing = (2.0 * jnp.exp(-t) * jnp.sin(pi * x) * jnp.sin(pi * y) * (pi * pi - 1.0)
               + jnp.exp(-3.0 * t) * jnp.sin(pi * x) ** 3 * jnp.sin(pi * y) ** 3)
    res = u_t + u ** 3 - u - u_xx - u_yy - forcing
    loss_f = jnp.sum(res ** 2) / u_t.shape[0]
    return loss_b + loss_f


def _make_inputs(key, n_b, n_f):
    ks = jax.random.split(key, 10)
    # PINN column-vector convention: (N, 1)
    t = jax.random.uniform(ks[0], (n_f, 1), jnp.float32)
    x = jax.random.uniform(ks[1], (n_f, 1), jnp.float32, minval=-1.0, maxval=1.0)
    y = jax.random.uniform(ks[2], (n_f, 1), jnp.float32, minval=-1.0, maxval=1.0)
    output_Nu = jax.random.normal(ks[3], (n_b, 1), jnp.float32)
    Nu = jax.random.normal(ks[4], (n_b, 1), jnp.float32)
    u = jax.random.normal(ks[5], (n_f, 1), jnp.float32)
    u_t = jax.random.normal(ks[6], (n_f, 1), jnp.float32)
    u_xx = jax.random.normal(ks[7], (n_f, 1), jnp.float32)
    u_yy = jax.random.normal(ks[8], (n_f, 1), jnp.float32)
    u_t_grad = jax.random.normal(ks[9], (n_f, 1), jnp.float32)  # unused by forward
    return t, x, y, output_Nu, Nu, u, u_t, u_xx, u_yy, u_t_grad


if __name__ == "__main__":
    key = jax.random.PRNGKey(0)
    k1, k2 = jax.random.split(key)

    # Test 1: PINN-typical small sizes -> grid collapses to a single step.
    args1 = _make_inputs(k1, n_b=256, n_f=512)
    loss1 = jax.block_until_ready(ave_mse(*args1))
    ref1 = ave_mse_ref(*args1)
    assert jnp.allclose(loss1, ref1, rtol=1e-4, atol=1e-5), (loss1, ref1)

    # Test 2: ragged sizes + small max_tile_rows to exercise the multi-step
    # pipelined reduction path (4 grid steps, gated masked tail tile).
    args2 = _make_inputs(k2, n_b=300, n_f=3 * 64 * _LANES + 77)
    loss2 = jax.block_until_ready(ave_mse(*args2, max_tile_rows=64))
    ref2 = ave_mse_ref(*args2)
    assert jnp.allclose(loss2, ref2, rtol=1e-4, atol=1e-5), (loss2, ref2)

    # Test 3: two-core "parallel" split (v7x megacore path); runs serially and
    # stays correct on single-TC chips.
    loss3 = jax.block_until_ready(ave_mse(*args2, max_tile_rows=64, num_cores=2))
    assert jnp.allclose(loss3, ref2, rtol=1e-4, atol=1e-5), (loss3, ref2)

    print("KERNEL_OK")
</pallas_src>

<mosaic_0001>
module attributes {stable_mosaic.version = 11 : i64} {
  func.func @_ave_mse_kernel(%arg0: i32, %arg1: i32, %arg2: memref<2x8x128xf32, #tpu.memory_space<vmem>>, %arg3: memref<7x8x128xf32, #tpu.memory_space<vmem>>, %arg4: memref<1x1x1xf32, #tpu.memory_space<vmem>>, %arg5: memref<8x128xf32, #tpu.memory_space<vmem>>) attributes {dimension_semantics = [#tpu.dimension_semantics<parallel>, #tpu.dimension_semantics<arbitrary>], iteration_bounds = array<i64: 1, 1>, scalar_prefetch = 0 : i64, scratch_operands = 1 : i64, tpu.core_type = #tpu.core_type<tc>, window_params = [{pipeline_mode = #tpu.pipeline_mode<synchronous>, transform_indices = @transform_0, window_bounds = array<i64: 2, 8, 128>}, {transform_indices = @transform_1, window_bounds = array<i64: 7, 8, 128>}, {transform_indices = @transform_2, window_bounds = array<i64: 1, 1, 1>}]} {
    %c0_i32 = arith.constant 0 : i32
    %0 = arith.cmpi eq, %arg1, %c0_i32 : i32
    %1 = arith.extui %0 : i1 to i32
    %c0_i32_0 = arith.constant 0 : i32
    %2 = arith.cmpi ne, %1, %c0_i32_0 : i32
    scf.if %2 {
      %cst_23 = arith.constant 0.000000e+00 : f32
      %56 = vector.broadcast %cst_23 : f32 to vector<8x128xf32>
      %c0_24 = arith.constant 0 : index
      %c0_25 = arith.constant 0 : index
      %57 = vector.load %arg5[%c0_24, %c0_25] : memref<8x128xf32, #tpu.memory_space<vmem>>, vector<8x128xf32>
      tpu.vector_store %arg5[%c0_24, %c0_25], %56 {strides = array<i32>} : memref<8x128xf32, #tpu.memory_space<vmem>>, vector<8x128xf32>,
    } else {
    }
    %c0 = arith.constant 0 : index
    %c0_1 = arith.constant 0 : index
    %c0_2 = arith.constant 0 : index
    %3 = vector.load %arg3[%c0, %c0_1, %c0_2] : memref<7x8x128xf32, #tpu.memory_space<vmem>>, vector<1x8x128xf32>
    %4 = vector.shape_cast %3 : vector<1x8x128xf32> to vector<8x128xf32>
    %c1 = arith.constant 1 : index
    %c0_3 = arith.constant 0 : index
    %c0_4 = arith.constant 0 : index
    %5 = vector.load %arg3[%c1, %c0_3, %c0_4] : memref<7x8x128xf32, #tpu.memory_space<vmem>>, vector<1x8x128xf32>
    %6 = vector.shape_cast %5 : vector<1x8x128xf32> to vector<8x128xf32>
    %c2 = arith.constant 2 : index
    %c0_5 = arith.constant 0 : index
    %c0_6 = arith.constant 0 : index
    %7 = vector.load %arg3[%c2, %c0_5, %c0_6] : memref<7x8x128xf32, #tpu.memory_space<vmem>>, vector<1x8x128xf32>
    %8 = vector.shape_cast %7 : vector<1x8x128xf32> to vector<8x128xf32>
    %c3 = arith.constant 3 : index
    %c0_7 = arith.constant 0 : index
    %c0_8 = arith.constant 0 : index
    %9 = vector.load %arg3[%c3, %c0_7, %c0_8] : memref<7x8x128xf32, #tpu.memory_space<vmem>>, vector<1x8x128xf32>
    %10 = vector.shape_cast %9 : vector<1x8x128xf32> to vector<8x128xf32>
    %c4 = arith.constant 4 : index
    %c0_9 = arith.constant 0 : index
    %c0_10 = arith.constant 0 : index
    %11 = vector.load %arg3[%c4, %c0_9, %c0_10] : memref<7x8x128xf32, #tpu.memory_space<vmem>>, vector<1x8x128xf32>
    %12 = vector.shape_cast %11 : vector<1x8x128xf32> to vector<8x128xf32>
    %c5 = arith.constant 5 : index
    %c0_11 = arith.constant 0 : index
    %c0_12 = arith.constant 0 : index
    %13 = vector.load %arg3[%c5, %c0_11, %c0_12] : memref<7x8x128xf32, #tpu.memory_space<vmem>>, vector<1x8x128xf32>
    %14 = vector.shape_cast %13 : vector<1x8x128xf32> to vector<8x128xf32>
    %c6 = arith.constant 6 : index
    %c0_13 = arith.constant 0 : index
    %c0_14 = arith.constant 0 : index
    %15 = vector.load %arg3[%c6, %c0_13, %c0_14] : memref<7x8x128xf32, #tpu.memory_space<vmem>>, vector<1x8x128xf32>
    %16 = vector.shape_cast %15 : vector<1x8x128xf32> to vector<8x128xf32>
    %cst = arith.constant 0.000000e+00 : f32
    %17 = vector.broadcast %cst : f32 to vector<8x128xf32>
    %18 = arith.subf %17, %4 : vector<8x128xf32>
    %19 = math.exp %18 : vector<8x128xf32>
    %cst_15 = arith.constant 3.14159274 : f32
    %20 = vector.broadcast %cst_15 : f32 to vector<8x128xf32>
    %21 = arith.mulf %20, %6 : vector<8x128xf32>
    %22 = math.sin %21 : vector<8x128xf32>
    %cst_16 = arith.constant 3.14159274 : f32
    %23 = vector.broadcast %cst_16 : f32 to vector<8x128xf32>
    %24 = arith.mulf %23, %8 : vector<8x128xf32>
    %25 = math.sin %24 : vector<8x128xf32>
    %26 = arith.mulf %22, %25 : vector<8x128xf32>
    %27 = arith.mulf %19, %26 : vector<8x128xf32>
    %cst_17 = arith.constant 17.7392082 : f32
    %28 = vector.broadcast %cst_17 : f32 to vector<8x128xf32>
    %29 = arith.mulf %28, %27 : vector<8x128xf32>
    %30 = arith.mulf %19, %19 : vector<8x128xf32>
    %31 = arith.mulf %30, %19 : vector<8x128xf32>
    %32 = arith.mulf %26, %26 : vector<8x128xf32>
    %33 = arith.mulf %32, %26 : vector<8x128xf32>
    %34 = arith.mulf %31, %33 : vector<8x128xf32>
    %35 = arith.addf %29, %34 : vector<8x128xf32>
    %36 = arith.mulf %10, %10 : vector<8x128xf32>
    %37 = arith.mulf %36, %10 : vector<8x128xf32>
    %38 = arith.addf %12, %37 : vector<8x128xf32>
    %39 = arith.subf %38, %10 : vector<8x128xf32>
    %40 = arith.subf %39, %14 : vector<8x128xf32>
    %41 = arith.subf %40, %16 : vector<8x128xf32>
    %42 = arith.subf %41, %35 : vector<8x128xf32>
    %c1_i32 = arith.constant 1 : i32
    %43 = arith.muli %arg0, %c1_i32 : i32
    %44 = arith.addi %43, %arg1 : i32
    %c1_i32_18 = arith.constant 1 : i32
    %45 = arith.addi %44, %c1_i32_18 : i32
    %c1024_i32 = arith.constant 1024 : i32
    %46 = arith.muli %45, %c1024_i32 : i32
    %c512_i32 = arith.constant 512 : i32
    %47 = arith.cmpi sgt, %46, %c512_i32 : i32
    %true = arith.constant true
    %48 = arith.xori %47, %true : i1
    %49 = arith.extui %48 : i1 to i32
    %c0_i32_19 = arith.constant 0 : i32
    %50 = arith.cmpi ne, %49, %c0_i32_19 : i32
    scf.if %50 {
      %c0_23 = arith.constant 0 : index
      %c0_24 = arith.constant 0 : index
      %56 = vector.load %arg5[%c0_23, %c0_24] : memref<8x128xf32, #tpu.memory_space<vmem>>, vector<8x128xf32>
      %57 = arith.mulf %42, %42 : vector<8x128xf32>
      %58 = vector.shape_cast %57 : vector<8x128xf32> to vector<1x8x128xf32>
      %cst_25 = arith.constant dense<0.000000e+00> : vector<8x128xf32>
      %59 = vector.multi_reduction <add>, %58, %cst_25 [0] : vector<1x8x128xf32> to vector<8x128xf32>
      %60 = arith.addf %56, %59 : vector<8x128xf32>
      %c0_26 = arith.constant 0 : index
      %c0_27 = arith.constant 0 : index
      %61 = vector.load %arg5[%c0_26, %c0_27] : memref<8x128xf32, #tpu.memory_space<vmem>>, vector<8x128xf32>
      tpu.vector_store %arg5[%c0_26, %c0_27], %60 {strides = array<i32>} : memref<8x128xf32, #tpu.memory_space<vmem>>, vector<8x128xf32>,
    } else {
    }
    %51 = arith.extui %47 : i1 to i32
    %c0_i32_20 = arith.constant 0 : i32
    %52 = arith.cmpi ne, %51, %c0_i32_20 : i32
    scf.if %52 {
      %56 = tpu.iota {dimensions = array<i32: 0>} : vector<8x128xi32>
      %57 = tpu.iota {dimensions = array<i32: 1>} : vector<8x128xi32>
      %c8_i32 = arith.constant 8 : i32
      %58 = arith.muli %44, %c8_i32 : i32
      %59 = vector.broadcast %58 : i32 to vector<8x128xi32>
      %60 = arith.addi %59, %56 : vector<8x128xi32>
      %c128_i32 = arith.constant 128 : i32
      %61 = vector.broadcast %c128_i32 : i32 to vector<8x128xi32>
      %62 = arith.muli %60, %61 : vector<8x128xi32>
      %63 = arith.addi %62, %57 : vector<8x128xi32>
      %c512_i32_23 = arith.constant 512 : i32
      %64 = vector.broadcast %c512_i32_23 : i32 to vector<8x128xi32>
      %65 = arith.cmpi slt, %63, %64 : vector<8x128xi32>
      %cst_24 = arith.constant 0.000000e+00 : f32
      %66 = vector.broadcast %cst_24 : f32 to vector<8x128xf32>
      %67 = arith.select %65, %42, %66 : vector<8x128xi1>, vector<8x128xf32>
      %c0_25 = arith.constant 0 : index
      %c0_26 = arith.constant 0 : index
      %68 = vector.load %arg5[%c0_25, %c0_26] : memref<8x128xf32, #tpu.memory_space<vmem>>, vector<8x128xf32>
      %69 = arith.mulf %67, %67 : vector<8x128xf32>
      %70 = vector.shape_cast %69 : vector<8x128xf32> to vector<1x8x128xf32>
      %cst_27 = arith.constant dense<0.000000e+00> : vector<8x128xf32>
      %71 = vector.multi_reduction <add>, %70, %cst_27 [0] : vector<1x8x128xf32> to vector<8x128xf32>
      %72 = arith.addf %68, %71 : vector<8x128xf32>
      %c0_28 = arith.constant 0 : index
      %c0_29 = arith.constant 0 : index
      %73 = vector.load %arg5[%c0_28, %c0_29] : memref<8x128xf32, #tpu.memory_space<vmem>>, vector<8x128xf32>
      tpu.vector_store %arg5[%c0_28, %c0_29], %72 {strides = array<i32>} : memref<8x128xf32, #tpu.memory_space<vmem>>, vector<8x128xf32>,
    } else {
    }
    %c0_i32_21 = arith.constant 0 : i32
    %53 = arith.cmpi eq, %arg1, %c0_i32_21 : i32
    %54 = arith.extui %53 : i1 to i32
    %c0_i32_22 = arith.constant 0 : i32
    %55 = arith.cmpi ne, %54, %c0_i32_22 : i32
    scf.if %55 {
      %c0_23 = arith.constant 0 : index
      %c0_24 = arith.constant 0 : index
      %56 = vector.load %arg5[%c0_23, %c0_24] : memref<8x128xf32, #tpu.memory_space<vmem>>, vector<8x128xf32>
      %57 = vector.shape_cast %56 : vector<8x128xf32> to vector<1x8x128xf32>
      %cst_25 = arith.constant dense<0.000000e+00> : vector<1xf32>
      %58 = vector.multi_reduction <add>, %57, %cst_25 [1, 2] : vector<1x8x128xf32> to vector<1xf32>
      %59 = vector.shape_cast %58 : vector<1xf32> to vector<1x1x1xf32>
      %60 = vector.extract %59[0, 0, 0] : f32 from vector<1x1x1xf32>
      %61 = vector.broadcast %60 : f32 to vector<1x1xf32>
      %cst_26 = arith.constant 0.001953125 : f32
      %62 = vector.broadcast %cst_26 : f32 to vector<1x1xf32>
      %63 = arith.mulf %61, %62 : vector<1x1xf32>
      %c0_27 = arith.constant 0 : index
      %c0_28 = arith.constant 0 : index
      %c0_29 = arith.constant 0 : index
      %64 = vector.load %arg2[%c0_27, %c0_28, %c0_29] : memref<2x8x128xf32, #tpu.memory_space<vmem>>, vector<1x8x128xf32>
      %65 = vector.shape_cast %64 : vector<1x8x128xf32> to vector<8x128xf32>
      %c1_30 = arith.constant 1 : index
      %c0_31 = arith.constant 0 : index
      %c0_32 = arith.constant 0 : index
      %66 = vector.load %arg2[%c1_30, %c0_31, %c0_32] : memref<2x8x128xf32, #tpu.memory_space<vmem>>, vector<1x8x128xf32>
      %67 = vector.shape_cast %66 : vector<1x8x128xf32> to vector<8x128xf32>
      %68 = arith.subf %65, %67 : vector<8x128xf32>
      %69 = tpu.iota {dimensions = array<i32: 0>} : vector<8x128xi32>
      %70 = tpu.iota {dimensions = array<i32: 1>} : vector<8x128xi32>
      %c128_i32 = arith.constant 128 : i32
      %71 = vector.broadcast %c128_i32 : i32 to vector<8x128xi32>
      %72 = arith.muli %69, %71 : vector<8x128xi32>
      %73 = arith.addi %72, %70 : vector<8x128xi32>
      %c256_i32 = arith.constant 256 : i32
      %74 = vector.broadcast %c256_i32 : i32 to vector<8x128xi32>
      %75 = arith.cmpi slt, %73, %74 : vector<8x128xi32>
      %cst_33 = arith.constant 0.000000e+00 : f32
      %76 = vector.broadcast %cst_33 : f32 to vector<8x128xf32>
      %77 = arith.select %75, %68, %76 : vector<8x128xi1>, vector<8x128xf32>
      %78 = arith.mulf %77, %77 : vector<8x128xf32>
      %79 = vector.shape_cast %78 : vector<8x128xf32> to vector<1x8x128xf32>
      %cst_34 = arith.constant dense<0.000000e+00> : vector<1xf32>
      %80 = vector.multi_reduction <add>, %79, %cst_34 [1, 2] : vector<1x8x128xf32> to vector<1xf32>
      %81 = vector.shape_cast %80 : vector<1xf32> to vector<1x1x1xf32>
      %82 = vector.extract %81[0, 0, 0] : f32 from vector<1x1x1xf32>
      %83 = vector.broadcast %82 : f32 to vector<1x1xf32>
      %cst_35 = arith.constant 3.906250e-03 : f32
      %84 = vector.broadcast %cst_35 : f32 to vector<1x1xf32>
      %85 = arith.mulf %83, %84 : vector<1x1xf32>
      %c0_i32_36 = arith.constant 0 : i32
      %86 = arith.cmpi eq, %arg0, %c0_i32_36 : i32
      %cst_37 = arith.constant 0.000000e+00 : f32
      %87 = vector.broadcast %cst_37 : f32 to vector<1x1xf32>
      %88 = arith.select %86, %85, %87 : vector<1x1xf32>
      %89 = arith.addf %63, %88 : vector<1x1xf32>
      %90 = vector.shape_cast %89 : vector<1x1xf32> to vector<1x1x1xf32>
      %c0_38 = arith.constant 0 : index
      %c0_39 = arith.constant 0 : index
      %c0_40 = arith.constant 0 : index
      %91 = vector.load %arg4[%c0_38, %c0_39, %c0_40] : memref<1x1x1xf32, #tpu.memory_space<vmem>>, vector<1x1x1xf32>
      tpu.vector_store %arg4[%c0_38, %c0_39, %c0_40], %90 {strides = array<i32>} : memref<1x1x1xf32, #tpu.memory_space<vmem>>, vector<1x1x1xf32>,
    } else {
    }
    return
  }
  func.func @transform_0(%arg0: i32, %arg1: i32) -> (i32, i32, i32) {
    %c0_i32 = arith.constant 0 : i32
    %c0_i32_0 = arith.constant 0 : i32
    %c0_i32_1 = arith.constant 0 : i32
    %c0_i32_2 = arith.constant 0 : i32
    return %c0_i32, %c0_i32_0, %c0_i32_1 : i32, i32, i32
  }
  func.func @transform_1(%arg0: i32, %arg1: i32) -> (i32, i32, i32) {
    %c1_i32 = arith.constant 1 : i32
    %0 = arith.muli %arg0, %c1_i32 : i32
    %1 = arith.addi %0, %arg1 : i32
    %c0_i32 = arith.constant 0 : i32
    %c0_i32_0 = arith.constant 0 : i32
    %c0_i32_1 = arith.constant 0 : i32
    return %c0_i32, %1, %c0_i32_0 : i32, i32, i32
  }
  func.func @transform_2(%arg0: i32, %arg1: i32) -> (i32, i32, i32) {
    %c0_i32 = arith.constant 0 : i32
    %c0_i32_0 = arith.constant 0 : i32
    %c0_i32_1 = arith.constant 0 : i32
    return %arg0, %c0_i32, %c0_i32_0 : i32, i32, i32
  }
}

</mosaic_0001>

<llo_original>
// kernel: tpu_custom_call.1
$region0: #{tpu_custom_call.1}
  #allocation0 [shape = 'u32[]', space=smem, size = 0x4, offset = 0x4, fixed_abs, tag = 'smem constant byte address 0x4 - core index']
  #allocation1 [shape = 'u32[144,128]{1,0:T(1,128)}', space=vmem, size = 0x12000, scoped, tag = 'internal scratch']
  #allocation2 [shape = 'f32[8,128]{1,0:T(8,128)}', space=vmem, size = 0x1000, scoped, tag = 'scratch operand']
  %s0 = inlined_call_operand.hbm [shape: f32[2,8,128], index: 0, kind: input, shape index: {}]
  %s1 = inlined_call_operand.hbm [shape: f32[7,8,128], index: 1, kind: input, shape index: {}]
  %s2 = inlined_call_operand.hbm [shape: f32[1,1,1], index: 2, kind: output, shape index: {}]
  %s3 = sld [smem:[#allocation0]]
  $region42: #{tpu_custom_call.1} parent=0
    _
  %s5 = ssub.s32 1, %s3
  %s6 = scalar_select 0, %s5, %s3
  $region1: #{tpu_custom_call.1} parent=0
    #allocation3 [shape = 'u8[8192]{0}', space=vmem, size = 0x2000, scoped, tag = 'input window, operand 0, single buffered']
    #allocation4 [shape = 's32[1]{0}', space=sflag, size = 0x4, scoped, tag = 'scoped memory for tpu_custom_call.1']
    #allocation5 [shape = 's32[1]{0}', space=sflag, size = 0x4, scoped, tag = 'scoped memory for tpu_custom_call.1']
    #allocation6 [shape = 'u8[28672]{0}', space=vmem, size = 0x7000, scoped, tag = 'input window, operand 1, single buffered']
    #allocation7 [shape = 's32[1]{0}', space=sflag, size = 0x4, scoped, tag = 'scoped memory for tpu_custom_call.1']
    #allocation8 [shape = 'u8[512]{0}', space=vmem, size = 0x400, scoped, tag = 'output window, operand 0, single buffered']
    %7 = vsyncpa [#allocation4], 0
    %8 = vsyncpa [#allocation7], 0
    %9 = vsyncpa [#allocation5], 0
    // Predicated region
    $region2: #{tpu_custom_call.1} parent=1 // pred_check
      _
    $region3: #{tpu_custom_call.1} parent=1 // pred_check_branch
      %11 = sbr.rel (0) target = $region5
    $region4: #{tpu_custom_call.1} parent=1 // pred_region
      %s13 = ssub.s32 256, 256
      %14 = vsyncadd [#allocation4], %s13
      %s15 = sshll.u32 [#allocation3], 4
      %s16 = int_to_ptr.vmem [resolvable:$true] %s15
      %21 = dma.hbm_to_vmem [thread:$0]  %s0, 256, %s16, [#allocation4], 128, 128, 8
    $region5: #{tpu_custom_call.1} parent=1 // pred_fallthru
      _
    // Predicated region
    $region6: #{tpu_custom_call.1} parent=1 // pred_check
      _
    $region7: #{tpu_custom_call.1} parent=1 // pred_check_branch
      %23 = sbr.rel (0) target = $region9
    $region8: #{tpu_custom_call.1} parent=1 // pred_region
      %s24 = sadd.s32 0, 0
      %s26 = ssub.s32 896, 896
      %27 = vsyncadd [#allocation7], %s26
      %s28 = smul.addr %s24, 128
      %s29 = scalar_lea.hbm %s1, %s28
      %s30 = sshll.u32 [#allocation6], 4
      %s31 = int_to_ptr.vmem [resolvable:$true] %s30
      %36 = dma.hbm_to_vmem [thread:$0]  %s29, 896, %s31, [#allocation7], 128, 128, 8
    $region9: #{tpu_custom_call.1} parent=1 // pred_fallthru
      _
    // Predicated region
    $region10: #{tpu_custom_call.1} parent=1 // pred_check
      _
    $region11: #{tpu_custom_call.1} parent=1 // pred_check_branch
      %38 = sbr.rel (0) target = $region13
    $region12: #{tpu_custom_call.1} parent=1 // pred_region
      %39 = dma.done [#allocation4], 256
    $region13: #{tpu_custom_call.1} parent=1 // pred_fallthru
      _
    // Predicated region
    $region14: #{tpu_custom_call.1} parent=1 // pred_check
      _
    $region15: #{tpu_custom_call.1} parent=1 // pred_check_branch
      %41 = sbr.rel (0) target = $region17
    $region16: #{tpu_custom_call.1} parent=1 // pred_region
      %42 = dma.done [#allocation7], 896
    $region17: #{tpu_custom_call.1} parent=1 // pred_fallthru
      _
    %s43 = sadd.s32 0, 0
    %p44 = scmp.eq.s32.totalorder 0, 0
    // Predicated region
    $region18: #{tpu_custom_call.1} parent=1 // pred_check
      %p45 = pneg %p44
    $region19: #{tpu_custom_call.1} parent=1 // pred_check_branch
      %47 = sbr.rel (%p45) target = $region21
    $region20: #{tpu_custom_call.1} parent=1 // pred_region
      %48 = vst [vmem:[#allocation2] sm:$0xff] 0.0
    $region21: #{tpu_custom_call.1} parent=1 // pred_fallthru
      _
    %v49 = vld [vmem:[#allocation6] sm:$0xff]
    %s50 = scalar_lea.vmem [#allocation6], 8
    %v51 = vld [vmem:[%s50] sm:$0xff]
    %s52 = scalar_lea.vmem [#allocation6], 16
    %v53 = vld [vmem:[%s52] sm:$0xff]
    %s54 = scalar_lea.vmem [#allocation6], 24
    %v55 = vld [vmem:[%s54] sm:$0xff]
    %s56 = scalar_lea.vmem [#allocation6], 32
    %v57 = vld [vmem:[%s56] sm:$0xff]
    %s58 = scalar_lea.vmem [#allocation6], 40
    %v59 = vld [vmem:[%s58] sm:$0xff]
    %s60 = scalar_lea.vmem [#allocation6], 48
    %v61 = vld [vmem:[%s60] sm:$0xff]
    %v62 = vsub.f32 0.0, %v49
    %v63 = vmul.f32 %v62, 1.442695
    %v64 = vpow.pop %v63
    %v65 = vmul.f32 %v51, 3.1415927
    %v66 = vand.u32 2147483647, %v65
    %vm67 = vcmp.le.f32.partialorder %v66, 0.7853982
    %vm68 = vcmp.lt.s32.totalorder %v65, 0
    %v69 = vand.u32 %v65, 2139095040
    %v70 = vshrl.u32 %v69, 23
    %v71 = vsub.s32 %v70, 127
    %v72 = vand.u32 2147483647, %v65
    %v73 = vand.u32 %v72, 8388607
    %v74 = vor.u32 %v73, 8388608
    %v75 = vsub.s32 0, %v74
    %v76 = vadd.s32 %v71, 1
    %vm77 = vcmp.gt.s32.totalorder %v76, 0
    %v78 = vsel %vm77, %v76, 0
    %v79 = vshrl.u32 %v78, 5
    %v80 = vand.u32 %v78, 31
    %v81 = vsub.s32 32, %v80
    %v82 = vshrl.u32 683565275, %v81
    %v83 = vshll.u32 683565275, %v80
    %v84 = vshrl.u32 2475754826, %v81
    %v85 = vor.u32 %v83, %v84
    %v86 = vshll.u32 2475754826, %v80
    %v87 = vshrl.u32 2131351028, %v81
    %v88 = vor.u32 %v86, %v87
    %v89 = vshll.u32 2131351028, %v80
    %v90 = vshrl.u32 2102212464, %v81
    %v91 = vor.u32 %v89, %v90
    %v92 = vshll.u32 2102212464, %v80
    %v93 = vshrl.u32 920167782, %v81
    %v94 = vor.u32 %v92, %v93
    %v95 = vshll.u32 920167782, %v80
    %v96 = vshrl.u32 1326507024, %v81
    %v97 = vor.u32 %v95, %v96
    %vm98 = vcmp.lt.s32.totalorder %v79, 1
    %vm99 = vcmp.lt.s32.totalorder %v79, 2
    %vm100 = vcmp.lt.s32.totalorder %v79, 3
    %vm101 = vcmp.lt.s32.totalorder %v79, 4
    %v102 = vsel %vm98, %v82, %v85
    %v103 = vsel %vm101, %v91, 2102212464
    %v104 = vsel %vm100, %v88, %v103
    %v105 = vsel %vm99, %v102, %v104
    %v106 = vsel %vm98, %v85, %v88
    %v107 = vsel %vm101, %v94, 920167782
    %v108 = vsel %vm100, %v91, %v107
    %v109 = vsel %vm99, %v106, %v108
    %v110 = vsel %vm98, %v88, %v91
    %v111 = vsel %vm101, %v97, 1326507024
    %v112 = vsel %vm100, %v94, %v111
    %v113 = vsel %vm99, %v110, %v112
    %v114 = vshll.u32 %v74, 8
    %v115 = vmul.u32.u64.compose %v114, %v113
    %v116 = vextract.low.u32 %v115
    %v117 = vextract.high.u32 %v115
    %v118 = vmul.u32.u64.compose %v114, %v109
    %v119 = vextract.low.u32 %v118
    %v120 = vextract.high.u32 %v118
    %v121 = vmul.u32 %v114, %v105
    %v122 = vadd.s32 %v117, %v119
    %vm123 = vc.u32 %v117, %v119
    %v124 = vadd.s32 %v120, 1
    %v125 = vsel %vm123, %v124, %v120
    %v126 = vadd.s32 %v121, %v125
    %v127 = vadd.s32 %v126, 536870912
    %v128 = vshrl.u32 %v127, 30
    %v129 = vshll.u32 %v128, 30
    %v130 = vsub.s32 %v126, %v129
    %vm131 = vcmp.lt.s32.totalorder %v130, 0
    %v132 = vsub.s32 0, %v130
    %v133 = vsel %vm131, %v132, %v130
    %v134 = vclz %v133
    %v135 = vsub.s32 %v134, 2
    %vm136 = vcmp.gt.s32.totalorder 0, %v135
    %v137 = vsel %vm136, 0, %v135
    %v138 = vsub.s32 32, %v137
    %v139 = vshll.u32 %v130, %v137
    %v140 = vshrl.u32 %v122, %v138
    %v141 = vor.u32 %v139, %v140
    %v142 = vsub.s32 4294967266, %v137
    %v143 = vadd.s32 %v142, 127
    %v144 = vshll.u32 %v143, 23
    %v145 = vor.u32 4788187, %v144
    %v146 = vand.u32 2147483647, %v145
    %v148 = vcvt.s32.f32 %v141
    %v149 = vmul.f32 %v148, %v146
    %v150 = vxor.u32 %v149, 2147483648
    %v151 = vsel %vm68, %v150, %v149
    %v152 = vsub.s32 4, %v128
    %v153 = vsel %vm68, %v152, %v128
    %v154 = vsel %vm67, %v65, %v151
    %v155 = vsel %vm67, 0, %v153
    %v156 = vcosq.f32.pop %v154
    %v157 = vsinq.f32.pop %v154
    %vm158 = vweird.f32 %v65
    %v159 = vadd.s32 %v155, 3
    %v160 = vand.u32 %v159, 3
    %vm161 = vcmp.lt.s32.totalorder %v160, 2
    %vm162 = vcmp.eq.s32.totalorder %v160, 0
    %v163 = vxor.u32 %v157, 2147483648
    %v164 = vsel %vm162, %v156, %v163
    %vm165 = vcmp.eq.s32.totalorder %v160, 2
    %v166 = vxor.u32 %v156, 2147483648
    %v167 = vsel %vm165, %v166, %v157
    %v168 = vsel %vm161, %v164, %v167
    %v169 = vsel %vm158, nan, %v168
    %v170 = vmul.f32 %v53, 3.1415927
    %v171 = vand.u32 2147483647, %v170
    %vm172 = vcmp.le.f32.partialorder %v171, 0.7853982
    %vm173 = vcmp.lt.s32.totalorder %v170, 0
    %v174 = vand.u32 %v170, 2139095040
    %v175 = vshrl.u32 %v174, 23
    %v176 = vsub.s32 %v175, 127
    %v177 = vand.u32 2147483647, %v170
    %v178 = vand.u32 %v177, 8388607
    %v179 = vor.u32 %v178, 8388608
    %v180 = vsub.s32 0, %v179
    %v181 = vadd.s32 %v176, 1
    %vm182 = vcmp.gt.s32.totalorder %v181, 0
    %v183 = vsel %vm182, %v181, 0
    %v184 = vshrl.u32 %v183, 5
    %v185 = vand.u32 %v183, 31
    %v186 = vsub.s32 32, %v185
    %v187 = vshrl.u32 683565275, %v186
    %v188 = vshll.u32 683565275, %v185
    %v189 = vshrl.u32 2475754826, %v186
    %v190 = vor.u32 %v188, %v189
    %v191 = vshll.u32 2475754826, %v185
    %v192 = vshrl.u32 2131351028, %v186
    %v193 = vor.u32 %v191, %v192
    %v194 = vshll.u32 2131351028, %v185
    %v195 = vshrl.u32 2102212464, %v186
    %v196 = vor.u32 %v194, %v195
    %v197 = vshll.u32 2102212464, %v185
    %v198 = vshrl.u32 920167782, %v186
    %v199 = vor.u32 %v197, %v198
    %v200 = vshll.u32 920167782, %v185
    %v201 = vshrl.u32 1326507024, %v186
    %v202 = vor.u32 %v200, %v201
    %vm203 = vcmp.lt.s32.totalorder %v184, 1
    %vm204 = vcmp.lt.s32.totalorder %v184, 2
    %vm205 = vcmp.lt.s32.totalorder %v184, 3
    %vm206 = vcmp.lt.s32.totalorder %v184, 4
    %v207 = vsel %vm203, %v187, %v190
    %v208 = vsel %vm206, %v196, 2102212464
    %v209 = vsel %vm205, %v193, %v208
    %v210 = vsel %vm204, %v207, %v209
    %v211 = vsel %vm203, %v190, %v193
    %v212 = vsel %vm206, %v199, 920167782
    %v213 = vsel %vm205, %v196, %v212
    %v214 = vsel %vm204, %v211, %v213
    %v215 = vsel %vm203, %v193, %v196
    %v216 = vsel %vm206, %v202, 1326507024
    %v217 = vsel %vm205, %v199, %v216
    %v218 = vsel %vm204, %v215, %v217
    %v219 = vshll.u32 %v179, 8
    %v220 = vmul.u32.u64.compose %v219, %v218
    %v221 = vextract.low.u32 %v220
    %v222 = vextract.high.u32 %v220
    %v223 = vmul.u32.u64.compose %v219, %v214
    %v224 = vextract.low.u32 %v223
    %v225 = vextract.high.u32 %v223
    %v226 = vmul.u32 %v219, %v210
    %v227 = vadd.s32 %v222, %v224
    %vm228 = vc.u32 %v222, %v224
    %v229 = vadd.s32 %v225, 1
    %v230 = vsel %vm228, %v229, %v225
    %v231 = vadd.s32 %v226, %v230
    %v232 = vadd.s32 %v231, 536870912
    %v233 = vshrl.u32 %v232, 30
    %v234 = vshll.u32 %v233, 30
    %v235 = vsub.s32 %v231, %v234
    %vm236 = vcmp.lt.s32.totalorder %v235, 0
    %v237 = vsub.s32 0, %v235
    %v238 = vsel %vm236, %v237, %v235
    %v239 = vclz %v238
    %v240 = vsub.s32 %v239, 2
    %vm241 = vcmp.gt.s32.totalorder 0, %v240
    %v242 = vsel %vm241, 0, %v240
    %v243 = vsub.s32 32, %v242
    %v244 = vshll.u32 %v235, %v242
    %v245 = vshrl.u32 %v227, %v243
    %v246 = vor.u32 %v244, %v245
    %v247 = vsub.s32 4294967266, %v242
    %v248 = vadd.s32 %v247, 127
    %v249 = vshll.u32 %v248, 23
    %v250 = vor.u32 4788187, %v249
    %v251 = vand.u32 2147483647, %v250
    %v253 = vcvt.s32.f32 %v246
    %v254 = vmul.f32 %v253, %v251
    %v255 = vxor.u32 %v254, 2147483648
    %v256 = vsel %vm173, %v255, %v254
    %v257 = vsub.s32 4, %v233
    %v258 = vsel %vm173, %v257, %v233
    %v259 = vsel %vm172, %v170, %v256
    %v260 = vsel %vm172, 0, %v258
    %v261 = vcosq.f32.pop %v259
    %v262 = vsinq.f32.pop %v259
    %vm263 = vweird.f32 %v170
    %v264 = vadd.s32 %v260, 3
    %v265 = vand.u32 %v264, 3
    %vm266 = vcmp.lt.s32.totalorder %v265, 2
    %vm267 = vcmp.eq.s32.totalorder %v265, 0
    %v268 = vxor.u32 %v262, 2147483648
    %v269 = vsel %vm267, %v261, %v268
    %vm270 = vcmp.eq.s32.totalorder %v265, 2
    %v271 = vxor.u32 %v261, 2147483648
    %v272 = vsel %vm270, %v271, %v262
    %v273 = vsel %vm266, %v269, %v272
    %v274 = vsel %vm263, nan, %v273
    %v275 = vmul.f32 %v169, %v274
    %v276 = vmul.f32 %v64, %v275
    %v277 = vmul.f32 %v276, 17.739208
    %v278 = vmul.f32 %v64, %v64
    %v279 = vmul.f32 %v278, %v64
    %v280 = vmul.f32 %v275, %v275
    %v281 = vmul.f32 %v280, %v275
    %v282 = vmul.f32 %v279, %v281
    %v283 = vadd.f32 %v277, %v282
    %v284 = vmul.f32 %v55, %v55
    %v285 = vmul.f32 %v284, %v55
    %v286 = vadd.f32 %v57, %v285
    %v287 = vsub.f32 %v286, %v55
    %v288 = vsub.f32 %v287, %v59
    %v289 = vsub.f32 %v288, %v61
    %v290 = vsub.f32 %v289, %v283
    %s291 = sadd.s32 0, 0
    %s292 = sadd.s32 %s291, 1
    %s293 = smul.u32 %s292, 1024
    %p294 = scmp.gt.s32.totalorder %s293, 512
    %p295 = scmp.le.s32.totalorder %s293, 512
    // Predicated region
    $region22: #{tpu_custom_call.1} parent=1 // pred_check
      %p296 = pneg %p295
    $region23: #{tpu_custom_call.1} parent=1 // pred_check_branch
      %298 = sbr.rel (%p296) target = $region25
    $region24: #{tpu_custom_call.1} parent=1 // pred_region
      %v299 = vld [vmem:[#allocation2] sm:$0xff]
      %v300 = vmul.f32 %v290, %v290
      %v301 = vadd.f32 %v300, 0.0
      %v302 = vadd.f32 %v299, %v301
      %303 = vst [vmem:[#allocation2] sm:$0xff] %v302
    $region25: #{tpu_custom_call.1} parent=1 // pred_fallthru
      _
    // Predicated region
    $region26: #{tpu_custom_call.1} parent=1 // pred_check
      %p304 = pneg %p294
    $region27: #{tpu_custom_call.1} parent=1 // pred_check_branch
      %306 = sbr.rel (%p304) target = $region29
    $region28: #{tpu_custom_call.1} parent=1 // pred_region
      %v307 = vlaneseq
      %v308 = vshrl.u32 %v307, 7
      %v309 = vlaneseq
      %v310 = vand.u32 %v309, 127
      %s311 = smul.u32 %s291, 8
      %v312 = vstv %s311
      %v313 = vadd.s32 %v312, %v308
      %v314 = vmul.u32 %v313, 128
      %v315 = vadd.s32 %v314, %v310
      %vm316 = vcmp.lt.s32.totalorder %v315, 512
      %v317 = vsel %vm316, %v290, 0.0
      %v318 = vld [vmem:[#allocation2] sm:$0xff]
      %v319 = vmul.f32 %v317, %v317
      %v320 = vadd.f32 %v319, 0.0
      %v321 = vadd.f32 %v318, %v320
      %322 = vst [vmem:[#allocation2] sm:$0xff] %v321
    $region29: #{tpu_custom_call.1} parent=1 // pred_fallthru
      _
    // Predicated region
    $region30: #{tpu_custom_call.1} parent=1 // pred_check
      %p323 = pneg %p44
    $region31: #{tpu_custom_call.1} parent=1 // pred_check_branch
      %325 = sbr.rel (%p323) target = $region33
    $region32: #{tpu_custom_call.1} parent=1 // pred_region
      %v326 = vld [vmem:[#allocation2] sm:$0xff]
      %327 = vadd.xlane.f32.xlu0 %v326
      %v328 = vpop.xlane.xlu0 %327
      %v329 = vrot.slane %v328, 4
      %v330 = vadd.f32 %v328, %v329
      %v331 = vrot.slane %v330, 2
      %v332 = vadd.f32 %v330, %v331
      %v333 = vrot.slane %v332, 1
      %v334 = vadd.f32 %v332, %v333
      %s335 = vtos %v334
      %v336 = vstv %s335
      %v337 = vmul.f32 %v336, 0.001953125
      %v338 = vld [vmem:[#allocation3] sm:$0xff]
      %s339 = scalar_lea.vmem [#allocation3], 8
      %v340 = vld [vmem:[%s339] sm:$0xff]
      %v341 = vsub.f32 %v338, %v340
      %v342 = vlaneseq
      %v343 = vshrl.u32 %v342, 7
      %v344 = vlaneseq
      %v345 = vand.u32 %v344, 127
      %v346 = vmul.u32 %v343, 128
      %v347 = vadd.s32 %v346, %v345
      %vm348 = vcmp.lt.s32.totalorder %v347, 256
      %v349 = vsel %vm348, %v341, 0.0
      %v350 = vmul.f32 %v349, %v349
      %351 = vadd.xlane.f32.xlu0 %v350
      %v352 = vpop.xlane.xlu0 %351
      %v353 = vrot.slane %v352, 4
      %v354 = vadd.f32 %v352, %v353
      %v355 = vrot.slane %v354, 2
      %v356 = vadd.f32 %v354, %v355
      %v357 = vrot.slane %v356, 1
      %v358 = vadd.f32 %v356, %v357
      %s359 = vtos %v358
      %v360 = vstv %s359
      %v361 = vmul.f32 %v360, 0.00390625
      %p362 = scmp.eq.s32.totalorder 0, 0
      %s363 = scalar_select %p362, 1, 0
      %v364 = vstv %s363
      %vm365 = vcmp.eq.s32.totalorder %v364, 1
      %v366 = vsel %vm365, %v361, 0.0
      %v367 = vadd.f32 %v337, %v366
      %vm368 = vcmask 0
      %369 = vst.msk [vmem:[#allocation8] sm:$0x1] %vm368, %v367
    $region33: #{tpu_custom_call.1} parent=1 // pred_fallthru
      _
    // Predicated region
    $region34: #{tpu_custom_call.1} parent=1 // pred_check
      _
    $region35: #{tpu_custom_call.1} parent=1 // pred_check_branch
      %371 = sbr.rel (0) target = $region37
    $region36: #{tpu_custom_call.1} parent=1 // pred_region
      %s373 = ssub.s32 16, 16
      %374 = vsyncadd [#allocation5], %s373
      %s376 = sshll.u32 [#allocation8], 4
      %s377 = int_to_ptr.vmem [resolvable:$true] %s376
      %379 = dma.vmem_to_hbm [thread:$0]  %s377, 16, %s2, [#allocation5]
    $region37: #{tpu_custom_call.1} parent=1 // pred_fallthru
      _
    // Predicated region
    $region38: #{tpu_custom_call.1} parent=1 // pred_check
      _
    $region39: #{tpu_custom_call.1} parent=1 // pred_check_branch
      %381 = sbr.rel (0) target = $region41
    $region40: #{tpu_custom_call.1} parent=1 // pred_region
      %382 = dma.done [#allocation5], 16
    $region41: #{tpu_custom_call.1} parent=1 // pred_fallthru
      _
    %383 = vsyncpa [#allocation4], 1
    %384 = vsyncpa [#allocation7], 1
    %385 = vsyncpa [#allocation5], 1

</llo_original>
